<compile_context>
chip_gen: v5e
topology: v5e:2x2
jax: 0.10.0
libtpu: 0.0.40
codegen_flags: <defaults>
</compile_context>

<pallas_src>
import jax
import jax.numpy as jnp
from jax.experimental import pallas as pl
from jax.experimental.pallas import tpu as pltpu


def _mine_kernel(idx_ref, x_ref, y_ref, w1_ref, b1_ref, w2r_ref, b2_ref,
                 out_ref):
    n = x_ref.shape[0]

    x = x_ref[...]                                          # [N, Dx] f32
    y = y_ref[...]                                          # [N, Dy] f32

    # In-kernel row shuffle of y: unrolled dynamic sublane slices driven by
    # int32 indices in SMEM (no [N,N] one-hot, no extra matmul).
    rows = [y_ref[pl.ds(idx_ref[i], 1), :] for i in range(n)]
    y_shuf = jnp.concatenate(rows, axis=0)                  # [N, Dy] f32

    # Single fused first-Linear operand covering both branches:
    #   rows 0..N-1   -> [x | y]
    #   rows N..2N-1  -> [x | y_shuffle]
    top = jnp.concatenate([x, y], axis=-1)                  # [N, D]
    bot = jnp.concatenate([x, y_shuf], axis=-1)             # [N, D]
    stacked = jnp.concatenate([top, bot], axis=0).astype(jnp.bfloat16)

    # One MXU push: bf16 operands, f32 accumulation.
    proj = jnp.dot(stacked, w1_ref[...],
                   preferred_element_type=jnp.float32)      # [2N, H] f32
    h = jnp.maximum(proj + b1_ref[...], 0.0)                # ReLU

    # Second Linear (H -> 1) as a VPU multiply; reductions below.
    hw = h * w2r_ref[...]                                   # [2N, H] f32
    b2 = b2_ref[0]                                          # scalar f32
    inv_n = jnp.float32(1.0 / n)

    # mean(T0): single full reduce over the first N rows (bias folded in).
    mean_t0 = jnp.sum(hw[:n]) * inv_n + b2

    # Per-row T1 logits for the shuffled branch; stable log-mean-exp:
    #   log(mean(exp(t1))) = m + log(mean(exp(t1 - m))).
    t1 = jnp.sum(hw[n:], axis=-1, keepdims=True) + b2       # [N, 1] f32
    m = jnp.max(t1)
    log_mean_exp_t1 = m + jnp.log(jnp.sum(jnp.exp(t1 - m)) * inv_n)

    out_ref[0, 0] = mean_t0 - log_mean_exp_t1


def prepare_mine_params(params):
    """One-time parameter prep (hoisted out of the per-call jitted path).

    nn.Linear(in, out) weight is [out, in]; params store the transpose
    [in, out] so the kernel can do row-major x @ W directly.
    """
    return {
        "w1": params["w1"].astype(jnp.bfloat16),                 # [D, H]
        "b1": params["b1"].reshape(1, -1).astype(jnp.float32),   # [1, H]
        "w2r": params["w2"].reshape(1, -1).astype(jnp.float32),  # [1, H]
        "b2": params["b2"].reshape(1).astype(jnp.float32),       # [1]
    }


def mine_forward(x_samples, y_samples, prep, shuffle_key):
    """Pallas implementation of MINE.forward.

    x_samples: [N, x_dim] float32
    y_samples: [N, y_dim] float32
    prep: output of prepare_mine_params
    shuffle_key: PRNG key standing in for torch.randint (with replacement).
    Returns: scalar float32 lower bound.
    """
    n = y_samples.shape[0]

    # Uniform-with-replacement shuffle indices (matches torch.randint).
    random_index = jax.random.randint(shuffle_key, (n,), 0, n, dtype=jnp.int32)

    smem = pltpu.MemorySpace.SMEM
    vmem = pltpu.MemorySpace.VMEM
    out = pl.pallas_call(
        _mine_kernel,
        in_specs=[
            pl.BlockSpec(memory_space=smem),   # shuffle indices [N] int32
            pl.BlockSpec(memory_space=vmem),   # x  [N, Dx] f32
            pl.BlockSpec(memory_space=vmem),   # y  [N, Dy] f32
            pl.BlockSpec(memory_space=vmem),   # w1 [D, H] bf16
            pl.BlockSpec(memory_space=vmem),   # b1 [1, H] f32
            pl.BlockSpec(memory_space=vmem),   # w2 (row) [1, H] f32
            pl.BlockSpec(memory_space=smem),   # b2 [1] f32
        ],
        out_specs=pl.BlockSpec(memory_space=smem),
        out_shape=jax.ShapeDtypeStruct((1, 1), jnp.float32),
    )(random_index, x_samples, y_samples,
      prep["w1"], prep["b1"], prep["w2r"], prep["b2"])
    return out[0, 0]


def init_mine_params(key, x_dim, y_dim, hidden_size):
    """Deterministic parameter init matching nn.Linear fan-in bounds."""
    d = x_dim + y_dim
    k1, k2, k3, k4 = jax.random.split(key, 4)
    bound1 = 1.0 / jnp.sqrt(jnp.float32(d))
    bound2 = 1.0 / jnp.sqrt(jnp.float32(hidden_size))
    return {
        "w1": jax.random.uniform(k1, (d, hidden_size), jnp.float32,
                                 -bound1, bound1),
        "b1": jax.random.uniform(k2, (hidden_size,), jnp.float32,
                                 -bound1, bound1),
        "w2": jax.random.uniform(k3, (hidden_size, 1), jnp.float32,
                                 -bound2, bound2),
        "b2": jax.random.uniform(k4, (1,), jnp.float32, -bound2, bound2),
    }


if __name__ == "__main__":
    # Small shapes consistent with the module: batch N=8, x_dim=16, y_dim=16,
    # hidden_size=32.
    N, X_DIM, Y_DIM, HIDDEN = 8, 16, 16, 32

    root = jax.random.PRNGKey(0)
    k_param, k_x, k_y, k_shuf = jax.random.split(root, 4)

    params = init_mine_params(k_param, X_DIM, Y_DIM, HIDDEN)
    prep = prepare_mine_params(params)
    x = jax.random.normal(k_x, (N, X_DIM), jnp.float32)
    y = jax.random.normal(k_y, (N, Y_DIM), jnp.float32)

    lower_bound = jax.jit(mine_forward)(x, y, prep, k_shuf)
    jax.block_until_ready(lower_bound)

    # Pure-JAX reference of the same computation (same indices, same bf16
    # matmul operands, f32 accumulation and elementwise).
    idx = jax.random.randint(k_shuf, (N,), 0, N, dtype=jnp.int32)
    y_shuf = y[idx]

    def T(x_in, y_in):
        xy = jnp.concatenate([x_in, y_in], axis=-1).astype(jnp.bfloat16)
        p = jnp.dot(xy, params["w1"].astype(jnp.bfloat16),
                    preferred_element_type=jnp.float32)
        h = jnp.maximum(p + params["b1"][None, :], 0.0)
        return h @ params["w2"] + params["b2"]

    t0 = T(x, y)
    t1 = T(x, y_shuf)
    ref = jnp.mean(t0) - jnp.log(jnp.mean(jnp.exp(t1)))

    assert jnp.allclose(lower_bound, ref, atol=5e-4, rtol=5e-4), (
        float(lower_bound), float(ref))
    print("KERNEL_OK")
</pallas_src>

<mosaic_0001>
module attributes {stable_mosaic.version = 11 : i64} {
  func.func @_mine_kernel(%arg0: memref<8xi32, #tpu.memory_space<smem>>, %arg1: memref<8x16xf32, #tpu.memory_space<vmem>>, %arg2: memref<8x16xf32, #tpu.memory_space<vmem>>, %arg3: memref<32x32xbf16, #tpu.memory_space<vmem>>, %arg4: memref<1x32xf32, #tpu.memory_space<vmem>>, %arg5: memref<1x32xf32, #tpu.memory_space<vmem>>, %arg6: memref<1xf32, #tpu.memory_space<smem>>, %arg7: memref<1x1xf32, #tpu.memory_space<smem>>) attributes {dimension_semantics = [], scalar_prefetch = 0 : i64, scratch_operands = 0 : i64, tpu.core_type = #tpu.core_type<tc>} {
    %c0 = arith.constant 0 : index
    %c0_0 = arith.constant 0 : index
    %0 = vector.load %arg1[%c0, %c0_0] : memref<8x16xf32, #tpu.memory_space<vmem>>, vector<8x16xf32>
    %c0_1 = arith.constant 0 : index
    %c0_2 = arith.constant 0 : index
    %1 = vector.load %arg2[%c0_1, %c0_2] : memref<8x16xf32, #tpu.memory_space<vmem>>, vector<8x16xf32>
    %c0_3 = arith.constant 0 : index
    %2 = memref.load %arg0[%c0_3] : memref<8xi32, #tpu.memory_space<smem>>
    %3 = arith.index_cast %2 : i32 to index
    %c0_4 = arith.constant 0 : index
    %4 = vector.load %arg2[%3, %c0_4] : memref<8x16xf32, #tpu.memory_space<vmem>>, vector<1x16xf32>
    %c1 = arith.constant 1 : index
    %5 = memref.load %arg0[%c1] : memref<8xi32, #tpu.memory_space<smem>>
    %6 = arith.index_cast %5 : i32 to index
    %c0_5 = arith.constant 0 : index
    %7 = vector.load %arg2[%6, %c0_5] : memref<8x16xf32, #tpu.memory_space<vmem>>, vector<1x16xf32>
    %c2 = arith.constant 2 : index
    %8 = memref.load %arg0[%c2] : memref<8xi32, #tpu.memory_space<smem>>
    %9 = arith.index_cast %8 : i32 to index
    %c0_6 = arith.constant 0 : index
    %10 = vector.load %arg2[%9, %c0_6] : memref<8x16xf32, #tpu.memory_space<vmem>>, vector<1x16xf32>
    %c3 = arith.constant 3 : index
    %11 = memref.load %arg0[%c3] : memref<8xi32, #tpu.memory_space<smem>>
    %12 = arith.index_cast %11 : i32 to index
    %c0_7 = arith.constant 0 : index
    %13 = vector.load %arg2[%12, %c0_7] : memref<8x16xf32, #tpu.memory_space<vmem>>, vector<1x16xf32>
    %c4 = arith.constant 4 : index
    %14 = memref.load %arg0[%c4] : memref<8xi32, #tpu.memory_space<smem>>
    %15 = arith.index_cast %14 : i32 to index
    %c0_8 = arith.constant 0 : index
    %16 = vector.load %arg2[%15, %c0_8] : memref<8x16xf32, #tpu.memory_space<vmem>>, vector<1x16xf32>
    %c5 = arith.constant 5 : index
    %17 = memref.load %arg0[%c5] : memref<8xi32, #tpu.memory_space<smem>>
    %18 = arith.index_cast %17 : i32 to index
    %c0_9 = arith.constant 0 : index
    %19 = vector.load %arg2[%18, %c0_9] : memref<8x16xf32, #tpu.memory_space<vmem>>, vector<1x16xf32>
    %c6 = arith.constant 6 : index
    %20 = memref.load %arg0[%c6] : memref<8xi32, #tpu.memory_space<smem>>
    %21 = arith.index_cast %20 : i32 to index
    %c0_10 = arith.constant 0 : index
    %22 = vector.load %arg2[%21, %c0_10] : memref<8x16xf32, #tpu.memory_space<vmem>>, vector<1x16xf32>
    %c7 = arith.constant 7 : index
    %23 = memref.load %arg0[%c7] : memref<8xi32, #tpu.memory_space<smem>>
    %24 = arith.index_cast %23 : i32 to index
    %c0_11 = arith.constant 0 : index
    %25 = vector.load %arg2[%24, %c0_11] : memref<8x16xf32, #tpu.memory_space<vmem>>, vector<1x16xf32>
    %26 = tpu.concatenate %4, %7, %10, %13, %16, %19, %22, %25 in 0 : vector<1x16xf32>, vector<1x16xf32>, vector<1x16xf32>, vector<1x16xf32>, vector<1x16xf32>, vector<1x16xf32>, vector<1x16xf32>, vector<1x16xf32> -> vector<8x16xf32>
    %27 = tpu.concatenate %0, %1 in 1 : vector<8x16xf32>, vector<8x16xf32> -> vector<8x32xf32>
    %28 = tpu.concatenate %0, %26 in 1 : vector<8x16xf32>, vector<8x16xf32> -> vector<8x32xf32>
    %29 = tpu.concatenate %27, %28 in 0 : vector<8x32xf32>, vector<8x32xf32> -> vector<16x32xf32>
    %30 = arith.truncf %29 : vector<16x32xf32> to vector<16x32xbf16>
    %c0_12 = arith.constant 0 : index
    %c0_13 = arith.constant 0 : index
    %31 = vector.load %arg3[%c0_12, %c0_13] : memref<32x32xbf16, #tpu.memory_space<vmem>>, vector<32x32xbf16>
    %cst = arith.constant dense<0.000000e+00> : vector<16x32xf32>
    %32 = tpu.matmul %30, %31, %cst {dimension_numbers = #tpu.dot_dimension_numbers<[1], [0], [0], [1], [0, 0, 1, 1], [], []>} : vector<16x32xbf16>, vector<32x32xbf16>, vector<16x32xf32> -> vector<16x32xf32>
    %c0_14 = arith.constant 0 : index
    %c0_15 = arith.constant 0 : index
    %33 = vector.load %arg4[%c0_14, %c0_15] : memref<1x32xf32, #tpu.memory_space<vmem>>, vector<1x32xf32>
    %34 = vector.broadcast %33 : vector<1x32xf32> to vector<16x32xf32>
    %35 = arith.addf %32, %34 : vector<16x32xf32>
    %cst_16 = arith.constant 0.000000e+00 : f32
    %36 = vector.broadcast %cst_16 : f32 to vector<16x32xf32>
    %37 = arith.maximumf %35, %36 : vector<16x32xf32>
    %c0_17 = arith.constant 0 : index
    %c0_18 = arith.constant 0 : index
    %38 = vector.load %arg5[%c0_17, %c0_18] : memref<1x32xf32, #tpu.memory_space<vmem>>, vector<1x32xf32>
    %39 = vector.broadcast %38 : vector<1x32xf32> to vector<16x32xf32>
    %40 = arith.mulf %37, %39 : vector<16x32xf32>
    %c0_19 = arith.constant 0 : index
    %41 = memref.load %arg6[%c0_19] : memref<1xf32, #tpu.memory_space<smem>>
    %42 = vector.extract_strided_slice %40 {offsets = [0, 0], sizes = [8, 32], strides = [1, 1]} : vector<16x32xf32> to vector<8x32xf32>
    %43 = vector.shape_cast %42 : vector<8x32xf32> to vector<1x8x32xf32>
    %cst_20 = arith.constant dense<0.000000e+00> : vector<1xf32>
    %44 = vector.multi_reduction <add>, %43, %cst_20 [1, 2] : vector<1x8x32xf32> to vector<1xf32>
    %45 = vector.shape_cast %44 : vector<1xf32> to vector<1x1x1xf32>
    %46 = vector.extract %45[0, 0, 0] : f32 from vector<1x1x1xf32>
    %cst_21 = arith.constant 1.250000e-01 : f32
    %47 = arith.mulf %46, %cst_21 : f32
    %48 = arith.addf %47, %41 : f32
    %49 = vector.extract_strided_slice %40 {offsets = [8, 0], sizes = [8, 32], strides = [1, 1]} : vector<16x32xf32> to vector<8x32xf32>
    %cst_22 = arith.constant dense<0.000000e+00> : vector<8xf32>
    %50 = vector.multi_reduction <add>, %49, %cst_22 [1] : vector<8x32xf32> to vector<8xf32>
    %51 = vector.shape_cast %50 : vector<8xf32> to vector<8x1xf32>
    %52 = vector.broadcast %41 : f32 to vector<8x1xf32>
    %53 = arith.addf %51, %52 : vector<8x1xf32>
    %54 = vector.shape_cast %53 : vector<8x1xf32> to vector<1x8x1xf32>
    %cst_23 = arith.constant dense<0xFF800000> : vector<1xf32>
    %55 = vector.multi_reduction <maximumf>, %54, %cst_23 [1, 2] : vector<1x8x1xf32> to vector<1xf32>
    %56 = vector.shape_cast %55 : vector<1xf32> to vector<1x1x1xf32>
    %57 = vector.extract %56[0, 0, 0] : f32 from vector<1x1x1xf32>
    %58 = vector.broadcast %57 : f32 to vector<8x1xf32>
    %59 = arith.subf %53, %58 : vector<8x1xf32>
    %60 = math.exp %59 : vector<8x1xf32>
    %61 = vector.shape_cast %60 : vector<8x1xf32> to vector<1x8x1xf32>
    %cst_24 = arith.constant dense<0.000000e+00> : vector<1xf32>
    %62 = vector.multi_reduction <add>, %61, %cst_24 [1, 2] : vector<1x8x1xf32> to vector<1xf32>
    %63 = vector.shape_cast %62 : vector<1xf32> to vector<1x1x1xf32>
    %64 = vector.extract %63[0, 0, 0] : f32 from vector<1x1x1xf32>
    %cst_25 = arith.constant 1.250000e-01 : f32
    %65 = arith.mulf %64, %cst_25 : f32
    %66 = math.log %65 : f32
    %67 = arith.addf %57, %66 : f32
    %68 = arith.subf %48, %67 : f32
    %c0_26 = arith.constant 0 : index
    %c0_27 = arith.constant 0 : index
    %69 = memref.load %arg7[%c0_26, %c0_27] : memref<1x1xf32, #tpu.memory_space<smem>>
    memref.store %68, %arg7[%c0_26, %c0_27] : memref<1x1xf32, #tpu.memory_space<smem>>
    return
  }
}

</mosaic_0001>

<llo_original>
// kernel: mine_forward.1
$region0: #{mine_forward.1}
  #allocation0 [shape = 'u32[]', space=smem, size = 0x4, offset = 0x4, fixed_abs, tag = 'smem constant byte address 0x4 - core index']
  #allocation1 [shape = 'u32[72,128]{1,0:T(1,128)}', space=vmem, size = 0x9000, scoped, tag = 'internal scratch']
  #allocation2 [shape = 'f32[1]{0:T(128)S(6)}', space=smem, size = 0x200, scoped, tag = 'scoped memory for mine_forward.1']
  %s0 = inlined_call_operand.vmem [shape: s32[8], index: 0, kind: input, shape index: {}]
  %s1 = inlined_call_operand.vmem [shape: f32[8,16], index: 1, kind: input, shape index: {}]
  %s2 = inlined_call_operand.vmem [shape: f32[8,16], index: 2, kind: input, shape index: {}]
  %s3 = inlined_call_operand.vmem [shape: bf16[32,32], index: 3, kind: input, shape index: {}]
  %s4 = inlined_call_operand.vmem [shape: f32[1,32], index: 4, kind: input, shape index: {}]
  %s5 = inlined_call_operand.vmem [shape: f32[1,32], index: 5, kind: input, shape index: {}]
  %s6 = inlined_call_operand.<no memory space> [shape: f32[1], index: 6, kind: input, shape index: {}]
  %s7 = inlined_call_operand.hbm [shape: f32[1,1], index: 7, kind: output, shape index: {}]
  %s8 = sld [smem:[#allocation0]]
  $region42: #{mine_forward.1} parent=0
    _
  %s10 = ssub.s32 1, %s8
  %s11 = scalar_select 0, %s10, %s8
  %12 = sst [smem:[#allocation2]] %s6
  $region1: #{mine_forward.1} parent=0
    #allocation3 [shape = 'u8[512]{0}', space=smem, size = 0x200, scoped, tag = 'input window, operand 0, single buffered']
    #allocation4 [shape = 's32[1]{0}', space=sflag, size = 0x4, scoped, tag = 'scoped memory for mine_forward.1']
    #allocation5 [shape = 's32[1]{0}', space=sflag, size = 0x4, scoped, tag = 'scoped memory for mine_forward.1']
    #allocation6 [shape = 'u8[512]{0}', space=smem, size = 0x200, scoped, tag = 'output window, operand 0, single buffered']
    %13 = vsyncpa [#allocation5], 0
    %14 = vsyncpa [#allocation4], 0
    // Predicated region
    $region2: #{mine_forward.1} parent=1 // pred_check
      _
    $region3: #{mine_forward.1} parent=1 // pred_check_branch
      %16 = sbr.rel (0) target = $region5
    $region4: #{mine_forward.1} parent=1 // pred_region
      %18 = vsyncadd [#allocation5], 0
      %s20 = sshll.u32 %s0, 4
      %s21 = int_to_ptr.vmem [resolvable:$true] %s20
      %23 = dma.vmem_to_smem %s21, 16, [#allocation3], [#allocation5]
    $region5: #{mine_forward.1} parent=1 // pred_fallthru
      _
    // Predicated region
    $region6: #{mine_forward.1} parent=1 // pred_check
      _
    $region7: #{mine_forward.1} parent=1 // pred_check_branch
      %25 = sbr.rel (0) target = $region9
    $region8: #{mine_forward.1} parent=1 // pred_region
      _
    $region9: #{mine_forward.1} parent=1 // pred_fallthru
      _
    // Predicated region
    $region10: #{mine_forward.1} parent=1 // pred_check
      _
    $region11: #{mine_forward.1} parent=1 // pred_check_branch
      %27 = sbr.rel (0) target = $region13
    $region12: #{mine_forward.1} parent=1 // pred_region
      _
    $region13: #{mine_forward.1} parent=1 // pred_fallthru
      _
    // Predicated region
    $region14: #{mine_forward.1} parent=1 // pred_check
      _
    $region15: #{mine_forward.1} parent=1 // pred_check_branch
      %29 = sbr.rel (0) target = $region17
    $region16: #{mine_forward.1} parent=1 // pred_region
      _
    $region17: #{mine_forward.1} parent=1 // pred_fallthru
      _
    // Predicated region
    $region18: #{mine_forward.1} parent=1 // pred_check
      _
    $region19: #{mine_forward.1} parent=1 // pred_check_branch
      %31 = sbr.rel (0) target = $region21
    $region20: #{mine_forward.1} parent=1 // pred_region
      _
    $region21: #{mine_forward.1} parent=1 // pred_fallthru
      _
    // Predicated region
    $region22: #{mine_forward.1} parent=1 // pred_check
      _
    $region23: #{mine_forward.1} parent=1 // pred_check_branch
      %33 = sbr.rel (0) target = $region25
    $region24: #{mine_forward.1} parent=1 // pred_region
      _
    $region25: #{mine_forward.1} parent=1 // pred_fallthru
      _
    // Predicated region
    $region26: #{mine_forward.1} parent=1 // pred_check
      _
    $region27: #{mine_forward.1} parent=1 // pred_check_branch
      %35 = sbr.rel (0) target = $region29
    $region28: #{mine_forward.1} parent=1 // pred_region
      _
    $region29: #{mine_forward.1} parent=1 // pred_fallthru
      _
    // Predicated region
    $region30: #{mine_forward.1} parent=1 // pred_check
      _
    $region31: #{mine_forward.1} parent=1 // pred_check_branch
      %37 = sbr.rel (0) target = $region33
    $region32: #{mine_forward.1} parent=1 // pred_region
      %39 = dma.done [#allocation5], 16
    $region33: #{mine_forward.1} parent=1 // pred_fallthru
      _
    %40 = sfence
    %v42 = vld [vmem:[%s1] sm:$0xff]
    %v43 = vld [vmem:[%s2] sm:$0xff]
    %s44 = sld [smem:[#allocation3]]
    %s45 = scalar_lea.vmem %s2, %s44
    %v46 = vld [vmem:[%s45] sm:$0x1]
    %s47 = sld [smem:[#allocation3 + $0x1]]
    %s48 = scalar_lea.vmem %s2, %s47
    %v49 = vld [vmem:[%s48] sm:$0x1]
    %s50 = sld [smem:[#allocation3 + $0x2]]
    %s51 = scalar_lea.vmem %s2, %s50
    %v52 = vld [vmem:[%s51] sm:$0x1]
    %s53 = sld [smem:[#allocation3 + $0x3]]
    %s54 = scalar_lea.vmem %s2, %s53
    %v55 = vld [vmem:[%s54] sm:$0x1]
    %s56 = sld [smem:[#allocation3 + $0x4]]
    %s57 = scalar_lea.vmem %s2, %s56
    %v58 = vld [vmem:[%s57] sm:$0x1]
    %s59 = sld [smem:[#allocation3 + $0x5]]
    %s60 = scalar_lea.vmem %s2, %s59
    %v61 = vld [vmem:[%s60] sm:$0x1]
    %s62 = sld [smem:[#allocation3 + $0x6]]
    %s63 = scalar_lea.vmem %s2, %s62
    %v64 = vld [vmem:[%s63] sm:$0x1]
    %s65 = sld [smem:[#allocation3 + $0x7]]
    %s66 = scalar_lea.vmem %s2, %s65
    %v67 = vld [vmem:[%s66] sm:$0x1]
    %v69 = vrot.slane %v49, 7
    %v72 = vrot.slane %v52, 6
    %v75 = vrot.slane %v55, 5
    %v78 = vrot.slane %v58, 4
    %v81 = vrot.slane %v61, 3
    %v84 = vrot.slane %v64, 2
    %v87 = vrot.slane %v67, 1
    %vm89 = vcmask 1040384
    %v90 = vsel %vm89, %v46, %v69
    %vm91 = vcmask 1041408
    %v92 = vsel %vm91, %v90, %v72
    %vm93 = vcmask 1042432
    %v94 = vsel %vm93, %v92, %v75
    %vm95 = vcmask 1043456
    %v96 = vsel %vm95, %v94, %v78
    %vm97 = vcmask 1044480
    %v98 = vsel %vm97, %v96, %v81
    %vm99 = vcmask 1045504
    %v100 = vsel %vm99, %v98, %v84
    %vm101 = vcmask 1046528
    %v102 = vsel %vm101, %v100, %v87
    %104 = vrot.lane.b32.xlu0 %v43, 16
    %v105 = vpop.permute.xlu0 %104
    %vm107 = vcmask 130048
    %v108 = vsel %vm107, %v42, %v105
    %110 = vrot.lane.b32.xlu0 %v102, 16
    %v111 = vpop.permute.xlu0 %110
    %v113 = vsel %vm107, %v42, %v111
    %v114 = vpack.c.bf16 %v113, %v108
    %v115 = vld [vmem:[%s3] sm:$0xf]
    %v116 = vld [vmem:[%s3 + $0x4] sm:$0xf]
    %v117 = vld [vmem:[%s3 + $0x8] sm:$0xf]
    %v118 = vld [vmem:[%s3 + $0xc] sm:$0xf]
    %v119 = vld [vmem:[%s4] sm:$0x1]
    %v121 = vperm.slane %v119, 0
    %v127 = vunpack.c.l.b16 %v115
    %v128 = vunpack.c.l.b16 %v116
    %v129 = vunpack.c.l.b16 %v117
    %v130 = vunpack.c.l.b16 %v118
    %v131 = vpack.c.b16 %v128, %v127
    %v132 = vpack.c.b16 %v130, %v129
    %vm135 = vcmask 261120
    %v137 = vsel %vm135, %v114, 0
    %139 = vmatpush.bf16.msra.mxu0 0
    %140 = vmatpush.bf16.msra.mxu0 0
    %141 = vmatpush.bf16.msra.mxu0 0
    %142 = vmatpush.bf16.msra.mxu0 0
    %143 = vmatpush.bf16.msra.mxu0 0
    %144 = vmatpush.bf16.msra.mxu0 0
    %145 = vmatpush.bf16.msra.mxu0 %v132
    %146 = vmatpush.bf16.msra.mxu0 %v131
    %147 = vmatmul.bf16.gmra.mxu0 %v137
    %v148 = vpop.f32.mrf.mxu0
    %v149 = vadd.f32 %v121, %v148
    %v150 = vpop.f32.mrf.mxu0
    %v151 = vadd.f32 %v121, %v150
    %152 = vdwg.mxu0
    %v153 = vmax.f32 %v149, 0.0
    %v154 = vmax.f32 %v151, 0.0
    %v155 = vld [vmem:[%s5] sm:$0x1]
    %v157 = vperm.slane %v155, 0
    %v159 = vmul.f32 %v153, %v157
    %v160 = vmul.f32 %v154, %v157
    %s161 = sld [smem:[#allocation2]]
    %v162 = vsel %vm135, %v159, 0.0
    %163 = vadd.xlane.f32.xlu0 %v162
    %v164 = vpop.xlane.xlu0 %163
    %v165 = vrot.slane %v164, 4
    %v166 = vadd.f32 %v164, %v165
    %v167 = vrot.slane %v166, 2
    %v168 = vadd.f32 %v166, %v167
    %v169 = vrot.slane %v168, 1
    %v170 = vadd.f32 %v168, %v169
    %s171 = vtos %v170
    %s172 = smul.f32 %s171, 0.125
    %s173 = sadd.f32 %s172, %s161
    %v174 = vsel %vm135, %v160, 0.0
    %175 = vadd.xlane.f32.xlu0 %v174
    %v176 = vpop.xlane.xlu0 %175
    %v177 = vstv %s161
    %v178 = vadd.f32 %v176, %v177
    %v179 = vrot.slane %v178, 4
    %v180 = vmax.f32 %v178, %v179
    %v181 = vrot.slane %v180, 2
    %v182 = vmax.f32 %v180, %v181
    %v183 = vrot.slane %v182, 1
    %v184 = vmax.f32 %v182, %v183
    %s185 = vtos %v184
    %v186 = vstv %s185
    %v187 = vsub.f32 %v178, %v186
    %v188 = vmul.f32 %v187, 1.442695
    %v189 = vpow.pop %v188
    %vm190 = vcmask 7168
    %v191 = vsel %vm190, %v189, 0.0
    %192 = vadd.xlane.f32.xlu0 %v191
    %v193 = vpop.xlane.xlu0 %192
    %v194 = vrot.slane %v193, 4
    %v195 = vadd.f32 %v193, %v194
    %v196 = vrot.slane %v195, 2
    %v197 = vadd.f32 %v195, %v196
    %v198 = vrot.slane %v197, 1
    %v199 = vadd.f32 %v197, %v198
    %s200 = vtos %v199
    %s201 = smul.f32 %s200, 0.125
    %v202 = vstv %s201
    %v203 = vlog2.pop %v202
    %v204 = vmul.f32 %v203, 0.6931472
    %s205 = vtos %v204
    %s206 = sadd.f32 %s185, %s205
    %s207 = ssub.f32 %s173, %s206
    %s208 = scalar_lea.smem [#allocation6], 0
    %209 = sst [smem:[%s208]] %s207
    // Predicated region
    $region34: #{mine_forward.1} parent=1 // pred_check
      _
    $region35: #{mine_forward.1} parent=1 // pred_check_branch
      %211 = sbr.rel (0) target = $region37
    $region36: #{mine_forward.1} parent=1 // pred_region
      %213 = vsyncadd [#allocation4], 0
      %s215 = sshll.u32 %s7, 4
      %s216 = int_to_ptr.hbm [resolvable:$true] %s215
      %218 = dma.smem_to_hbm [#allocation6], 16, %s216, [#allocation4]
    $region37: #{mine_forward.1} parent=1 // pred_fallthru
      _
    // Predicated region
    $region38: #{mine_forward.1} parent=1 // pred_check
      _
    $region39: #{mine_forward.1} parent=1 // pred_check_branch
      %220 = sbr.rel (0) target = $region41
    $region40: #{mine_forward.1} parent=1 // pred_region
      %222 = dma.done [#allocation4], 16
    $region41: #{mine_forward.1} parent=1 // pred_fallthru
      _
    %223 = sfence
    %224 = vsyncpa [#allocation4], 1
    %225 = vsyncpa [#allocation5], 1

</llo_original>
